<compile_context>
chip_gen: v7x
topology: tpu7x:2x2x1
jax: 0.10.0
libtpu: 0.0.40
codegen_flags: <defaults>
</compile_context>

<pallas_src>
import functools

import jax
import jax.numpy as jnp
from jax.experimental import pallas as pl
from jax.experimental.pallas import tpu as pltpu

LANE = 128          # TPU lane width; hidden feature dims are padded to this
N_W_SLOTS = 9       # 128-row slots in the packed weight slab
N_B_ROWS = 8        # 6 real bias rows, padded to a multiple of 8 sublanes


# ----------------------------- kernel -------------------------------------- #
def actor_kernel(x_ref, w_ref, b_ref, out_ref, *, state_dim):
    def wslab(row, nrows):              # static slice of the bf16 weight slab
        return w_ref[pl.ds(row, nrows), :]

    def bias(i):                        # [1, 128] f32 bias row, broadcasts over B
        return b_ref[pl.ds(i, 1), :]

    def hswish(v):                      # relu6(v + 3) / 6 * v
        return jnp.minimum(jnp.maximum(v + 3.0, 0.0), 6.0) * v * (1.0 / 6.0)

    def mm(a, row, nrows):              # bf16 MXU dot, f32 accumulation
        return jnp.dot(a.astype(jnp.bfloat16), wslab(row, nrows),
                       preferred_element_type=jnp.float32)

    x00 = x_ref[...]                                        # [TB, state_dim] f32
    x10 = hswish(mm(x00, 0, state_dim) + bias(0))           # dense00 (K=state_dim)
    x11 = hswish(mm(x10, 1 * LANE, LANE) + bias(1))         # dense10
    x12 = hswish(mm(x11, 2 * LANE, LANE) + bias(2)) + x11   # dense11 + residual

    # x20 = cat(x10, x12): one deep-K (256) fused matmul over slots 3..4.
    x20 = jnp.concatenate([x10, x12], axis=-1)              # [TB, 256]
    x21 = hswish(mm(x20, 3 * LANE, 2 * LANE) + bias(3))     # dense20
    x22 = hswish(mm(x21, 5 * LANE, LANE) + bias(4)) + x21   # dense21 + residual

    # x30 = cat(x10, x12, x22): one deep-K (384) fused matmul over slots 6..8.
    # Dropout == identity in eval mode.
    x30 = jnp.concatenate([x10, x12, x22], axis=-1)         # [TB, 384]
    x_o = mm(x30, 6 * LANE, 3 * LANE) + bias(5)             # dense_o
    out_ref[...] = jnp.tanh(x_o)                            # lane-dense store


# ----------------------------- host-side packing --------------------------- #
def init_params(key, state_dim, action_dim, mid_dim):
    """Deterministic PyTorch-Linear-style init; weights stored as [in, out]."""
    def linear(key, fan_in, fan_out):
        kw, kb = jax.random.split(key)
        bound = 1.0 / jnp.sqrt(fan_in)
        w = jax.random.uniform(kw, (fan_in, fan_out), jnp.float32, -bound, bound)
        b = jax.random.uniform(kb, (1, fan_out), jnp.float32, -bound, bound)
        return w, b

    keys = jax.random.split(key, 6)
    p = {}
    p["w00"], p["b00"] = linear(keys[0], state_dim, mid_dim * 1)
    p["w10"], p["b10"] = linear(keys[1], mid_dim * 1, mid_dim * 1)
    p["w11"], p["b11"] = linear(keys[2], mid_dim * 1, mid_dim * 1)
    p["w20"], p["b20"] = linear(keys[3], mid_dim * 2, mid_dim * 2)
    p["w21"], p["b21"] = linear(keys[4], mid_dim * 2, mid_dim * 2)
    p["wo"],  p["bo"]  = linear(keys[5], mid_dim * 4, action_dim)
    return p


def pack_params(params, state_dim, action_dim, mid_dim):
    """Split the concat-consuming weights and pack everything into two slabs.

    Weight slab (bf16, [9*128, 128]):
      slot 0     : dense00  (only rows [0, state_dim) are used)
      slot 1, 2  : dense10, dense11
      slots 3-4  : dense20 as ONE deep-K [256,128]: rows 0..m-1 hit x10,
                   rows 128..128+m-1 hit x12 (activations are 128-lane padded).
      slot 5     : dense21
      slots 6-8  : dense_o as ONE deep-K [384,128] over cat(x10, x12, x22).
    Bias slab (f32, [8, 128]): rows 0..5 are the six biases, zero-padded.
    """
    m = mid_dim
    assert state_dim <= LANE and 2 * m <= LANE and action_dim <= LANE

    def put(slab, w, row):
        return slab.at[row:row + w.shape[0], : w.shape[1]].set(w)

    slab = jnp.zeros((N_W_SLOTS * LANE, LANE), jnp.float32)
    slab = put(slab, params["w00"], 0 * LANE)
    slab = put(slab, params["w10"], 1 * LANE)
    slab = put(slab, params["w11"], 2 * LANE)
    w20 = params["w20"]
    slab = put(slab, w20[:m], 3 * LANE)          # x10 part
    slab = put(slab, w20[m:], 4 * LANE)          # x12 part
    slab = put(slab, params["w21"], 5 * LANE)
    wo = params["wo"]
    slab = put(slab, wo[:m], 6 * LANE)           # x10 part
    slab = put(slab, wo[m:2 * m], 7 * LANE)      # x12 part
    slab = put(slab, wo[2 * m:], 8 * LANE)       # x22 part (2*m rows)
    w_slab = slab.astype(jnp.bfloat16)           # bf16 MXU inputs, f32 accum

    b_slab = jnp.zeros((N_B_ROWS, LANE), jnp.float32)
    for i, name in enumerate(["b00", "b10", "b11", "b20", "b21", "bo"]):
        b = params[name].reshape(-1)
        b_slab = b_slab.at[i, : b.shape[0]].set(b)
    return w_slab, b_slab


# ----------------------------- wrapper -------------------------------------- #
def _choose_tile(B):
    """Batch tile: >=16 rows (bf16 sublane packing); large B gets big tiles to
    amortize the ~0.35us/step overhead while keeping grid >= 2 so the
    'parallel' axis can shard across both v7x TensorCores."""
    rb16 = -(-B // 16) * 16
    if rb16 <= 128:
        return rb16                      # single grid step for small batches
    b128 = -(-B // 128) * 128
    return min(512, max(128, (b128 // 2 // 128) * 128))


def actor_forward(x, w_slab, b_slab):
    """Returns the lane-dense [B, 128] output; the consumer slices action_dim
    out (or fuses the slice into the next op) to avoid an extra memory pass."""
    B, state_dim = x.shape
    TB = _choose_tile(B)
    B_pad = -(-B // TB) * TB
    if B_pad != B:                       # row-only pad (tiny); NO lane padding
        x = jnp.zeros((B_pad, state_dim), x.dtype).at[:B].set(x)

    kernel = functools.partial(actor_kernel, state_dim=state_dim)
    out = pl.pallas_call(
        kernel,
        out_shape=jax.ShapeDtypeStruct((B_pad, LANE), jnp.float32),
        grid=(B_pad // TB,),
        in_specs=[
            # last dim == full array dim (state_dim) -> legal, un-padded input
            pl.BlockSpec((TB, state_dim), lambda i: (i, 0)),
            # weight/bias slabs: constant index_map -> DMA once, stay resident
            pl.BlockSpec((N_W_SLOTS * LANE, LANE), lambda i: (0, 0)),
            pl.BlockSpec((N_B_ROWS, LANE), lambda i: (0, 0)),
        ],
        out_specs=pl.BlockSpec((TB, LANE), lambda i: (i, 0)),
        compiler_params=pltpu.CompilerParams(
            dimension_semantics=("parallel",)),
    )(x, w_slab, b_slab)

    return out[:B] if B_pad != B else out


# ----------------------------- pure-JAX reference --------------------------- #
def actor_reference(x, params):
    def hswish(v):
        return jnp.clip(v + 3.0, 0.0, 6.0) / 6.0 * v

    def lin(v, w, b):
        return v @ w + b

    x10 = hswish(lin(x, params["w00"], params["b00"]))
    x11 = hswish(lin(x10, params["w10"], params["b10"]))
    x12 = hswish(lin(x11, params["w11"], params["b11"])) + x11
    x20 = jnp.concatenate((x10, x12), axis=1)
    x21 = hswish(lin(x20, params["w20"], params["b20"]))
    x22 = hswish(lin(x21, params["w21"], params["b21"])) + x21
    x30 = jnp.concatenate((x20, x22), axis=1)
    return jnp.tanh(lin(x30, params["wo"], params["bo"]))


if __name__ == "__main__":
    state_dim, action_dim, mid_dim = 16, 8, 32
    batch = 8

    key = jax.random.PRNGKey(0)
    k_x, k_p = jax.random.split(key)
    x = jax.random.normal(k_x, (batch, state_dim), dtype=jnp.float32)
    params = init_params(k_p, state_dim, action_dim, mid_dim)

    # Pack once (resident bf16 weight slab + f32 bias slab); reuse across calls.
    w_slab, b_slab = pack_params(params, state_dim, action_dim, mid_dim)

    out_dense = actor_forward(x, w_slab, b_slab)       # lane-dense [B, 128]
    out_dense = jax.block_until_ready(out_dense)
    out = out_dense[:, :action_dim]                    # consumer-side slice

    ref = actor_reference(x, params)
    assert out.shape == (batch, action_dim)
    assert bool(jnp.all(jnp.isfinite(out)))
    assert bool(jnp.all(jnp.abs(out) <= 1.0))          # tanh output range
    assert bool(jnp.all(out_dense[:, action_dim:] == 0.0))  # padded lanes exactly 0
    # bf16 MXU inputs with f32 accumulation -> relaxed tolerance vs f32 reference.
    err = float(jnp.max(jnp.abs(out - ref)))
    assert err < 3e-2, f"max abs err {err}"
    print("KERNEL_OK")
</pallas_src>

<mosaic_0001>
module attributes {stable_mosaic.version = 11 : i64} {
  func.func @actor_kernel(%arg0: i32, %arg1: memref<16x16xf32, #tpu.memory_space<vmem>>, %arg2: memref<1152x128xbf16, #tpu.memory_space<vmem>>, %arg3: memref<8x128xf32, #tpu.memory_space<vmem>>, %arg4: memref<16x128xf32, #tpu.memory_space<vmem>>) attributes {dimension_semantics = [#tpu.dimension_semantics<parallel>], iteration_bounds = array<i64: 1>, scalar_prefetch = 0 : i64, scratch_operands = 0 : i64, tpu.core_type = #tpu.core_type<tc>, window_params = [{transform_indices = @transform_0, window_bounds = array<i64: 16, 16>}, {pipeline_mode = #tpu.pipeline_mode<synchronous>, transform_indices = @transform_1, window_bounds = array<i64: 1152, 128>}, {pipeline_mode = #tpu.pipeline_mode<synchronous>, transform_indices = @transform_2, window_bounds = array<i64: 8, 128>}, {transform_indices = @transform_3, window_bounds = array<i64: 16, 128>}]} {
    %c0 = arith.constant 0 : index
    %c0_0 = arith.constant 0 : index
    %0 = vector.load %arg1[%c0, %c0_0] : memref<16x16xf32, #tpu.memory_space<vmem>>, vector<16x16xf32>
    %1 = arith.truncf %0 : vector<16x16xf32> to vector<16x16xbf16>
    %c0_1 = arith.constant 0 : index
    %c0_2 = arith.constant 0 : index
    %2 = vector.load %arg2[%c0_1, %c0_2] : memref<1152x128xbf16, #tpu.memory_space<vmem>>, vector<16x128xbf16>
    %cst = arith.constant dense<0.000000e+00> : vector<16x128xf32>
    %3 = tpu.matmul %1, %2, %cst {dimension_numbers = #tpu.dot_dimension_numbers<[1], [0], [0], [1], [0, 0, 1, 1], [], []>} : vector<16x16xbf16>, vector<16x128xbf16>, vector<16x128xf32> -> vector<16x128xf32>
    %c0_3 = arith.constant 0 : index
    %c0_4 = arith.constant 0 : index
    %4 = vector.load %arg3[%c0_3, %c0_4] : memref<8x128xf32, #tpu.memory_space<vmem>>, vector<1x128xf32>
    %5 = vector.broadcast %4 : vector<1x128xf32> to vector<16x128xf32>
    %6 = arith.addf %3, %5 : vector<16x128xf32>
    %cst_5 = arith.constant 3.000000e+00 : f32
    %7 = vector.broadcast %cst_5 : f32 to vector<16x128xf32>
    %8 = arith.addf %6, %7 : vector<16x128xf32>
    %cst_6 = arith.constant 0.000000e+00 : f32
    %9 = vector.broadcast %cst_6 : f32 to vector<16x128xf32>
    %10 = arith.maximumf %8, %9 : vector<16x128xf32>
    %cst_7 = arith.constant 6.000000e+00 : f32
    %11 = vector.broadcast %cst_7 : f32 to vector<16x128xf32>
    %12 = arith.minimumf %10, %11 : vector<16x128xf32>
    %13 = arith.mulf %12, %6 : vector<16x128xf32>
    %cst_8 = arith.constant 0.166666672 : f32
    %14 = vector.broadcast %cst_8 : f32 to vector<16x128xf32>
    %15 = arith.mulf %13, %14 : vector<16x128xf32>
    %16 = arith.truncf %15 : vector<16x128xf32> to vector<16x128xbf16>
    %c128 = arith.constant 128 : index
    %c0_9 = arith.constant 0 : index
    %17 = vector.load %arg2[%c128, %c0_9] : memref<1152x128xbf16, #tpu.memory_space<vmem>>, vector<128x128xbf16>
    %cst_10 = arith.constant dense<0.000000e+00> : vector<16x128xf32>
    %18 = tpu.matmul %16, %17, %cst_10 {dimension_numbers = #tpu.dot_dimension_numbers<[1], [0], [0], [1], [0, 0, 1, 1], [], []>} : vector<16x128xbf16>, vector<128x128xbf16>, vector<16x128xf32> -> vector<16x128xf32>
    %c1 = arith.constant 1 : index
    %c0_11 = arith.constant 0 : index
    %19 = vector.load %arg3[%c1, %c0_11] : memref<8x128xf32, #tpu.memory_space<vmem>>, vector<1x128xf32>
    %20 = vector.broadcast %19 : vector<1x128xf32> to vector<16x128xf32>
    %21 = arith.addf %18, %20 : vector<16x128xf32>
    %cst_12 = arith.constant 3.000000e+00 : f32
    %22 = vector.broadcast %cst_12 : f32 to vector<16x128xf32>
    %23 = arith.addf %21, %22 : vector<16x128xf32>
    %cst_13 = arith.constant 0.000000e+00 : f32
    %24 = vector.broadcast %cst_13 : f32 to vector<16x128xf32>
    %25 = arith.maximumf %23, %24 : vector<16x128xf32>
    %cst_14 = arith.constant 6.000000e+00 : f32
    %26 = vector.broadcast %cst_14 : f32 to vector<16x128xf32>
    %27 = arith.minimumf %25, %26 : vector<16x128xf32>
    %28 = arith.mulf %27, %21 : vector<16x128xf32>
    %cst_15 = arith.constant 0.166666672 : f32
    %29 = vector.broadcast %cst_15 : f32 to vector<16x128xf32>
    %30 = arith.mulf %28, %29 : vector<16x128xf32>
    %31 = arith.truncf %30 : vector<16x128xf32> to vector<16x128xbf16>
    %c256 = arith.constant 256 : index
    %c0_16 = arith.constant 0 : index
    %32 = vector.load %arg2[%c256, %c0_16] : memref<1152x128xbf16, #tpu.memory_space<vmem>>, vector<128x128xbf16>
    %cst_17 = arith.constant dense<0.000000e+00> : vector<16x128xf32>
    %33 = tpu.matmul %31, %32, %cst_17 {dimension_numbers = #tpu.dot_dimension_numbers<[1], [0], [0], [1], [0, 0, 1, 1], [], []>} : vector<16x128xbf16>, vector<128x128xbf16>, vector<16x128xf32> -> vector<16x128xf32>
    %c2 = arith.constant 2 : index
    %c0_18 = arith.constant 0 : index
    %34 = vector.load %arg3[%c2, %c0_18] : memref<8x128xf32, #tpu.memory_space<vmem>>, vector<1x128xf32>
    %35 = vector.broadcast %34 : vector<1x128xf32> to vector<16x128xf32>
    %36 = arith.addf %33, %35 : vector<16x128xf32>
    %cst_19 = arith.constant 3.000000e+00 : f32
    %37 = vector.broadcast %cst_19 : f32 to vector<16x128xf32>
    %38 = arith.addf %36, %37 : vector<16x128xf32>
    %cst_20 = arith.constant 0.000000e+00 : f32
    %39 = vector.broadcast %cst_20 : f32 to vector<16x128xf32>
    %40 = arith.maximumf %38, %39 : vector<16x128xf32>
    %cst_21 = arith.constant 6.000000e+00 : f32
    %41 = vector.broadcast %cst_21 : f32 to vector<16x128xf32>
    %42 = arith.minimumf %40, %41 : vector<16x128xf32>
    %43 = arith.mulf %42, %36 : vector<16x128xf32>
    %cst_22 = arith.constant 0.166666672 : f32
    %44 = vector.broadcast %cst_22 : f32 to vector<16x128xf32>
    %45 = arith.mulf %43, %44 : vector<16x128xf32>
    %46 = arith.addf %45, %30 : vector<16x128xf32>
    %47 = tpu.concatenate %15, %46 in 1 : vector<16x128xf32>, vector<16x128xf32> -> vector<16x256xf32>
    %48 = arith.truncf %47 : vector<16x256xf32> to vector<16x256xbf16>
    %c384 = arith.constant 384 : index
    %c0_23 = arith.constant 0 : index
    %49 = vector.load %arg2[%c384, %c0_23] : memref<1152x128xbf16, #tpu.memory_space<vmem>>, vector<256x128xbf16>
    %cst_24 = arith.constant dense<0.000000e+00> : vector<16x128xf32>
    %50 = tpu.matmul %48, %49, %cst_24 {dimension_numbers = #tpu.dot_dimension_numbers<[1], [0], [0], [1], [0, 0, 1, 1], [], []>} : vector<16x256xbf16>, vector<256x128xbf16>, vector<16x128xf32> -> vector<16x128xf32>
    %c3 = arith.constant 3 : index
    %c0_25 = arith.constant 0 : index
    %51 = vector.load %arg3[%c3, %c0_25] : memref<8x128xf32, #tpu.memory_space<vmem>>, vector<1x128xf32>
    %52 = vector.broadcast %51 : vector<1x128xf32> to vector<16x128xf32>
    %53 = arith.addf %50, %52 : vector<16x128xf32>
    %cst_26 = arith.constant 3.000000e+00 : f32
    %54 = vector.broadcast %cst_26 : f32 to vector<16x128xf32>
    %55 = arith.addf %53, %54 : vector<16x128xf32>
    %cst_27 = arith.constant 0.000000e+00 : f32
    %56 = vector.broadcast %cst_27 : f32 to vector<16x128xf32>
    %57 = arith.maximumf %55, %56 : vector<16x128xf32>
    %cst_28 = arith.constant 6.000000e+00 : f32
    %58 = vector.broadcast %cst_28 : f32 to vector<16x128xf32>
    %59 = arith.minimumf %57, %58 : vector<16x128xf32>
    %60 = arith.mulf %59, %53 : vector<16x128xf32>
    %cst_29 = arith.constant 0.166666672 : f32
    %61 = vector.broadcast %cst_29 : f32 to vector<16x128xf32>
    %62 = arith.mulf %60, %61 : vector<16x128xf32>
    %63 = arith.truncf %62 : vector<16x128xf32> to vector<16x128xbf16>
    %c640 = arith.constant 640 : index
    %c0_30 = arith.constant 0 : index
    %64 = vector.load %arg2[%c640, %c0_30] : memref<1152x128xbf16, #tpu.memory_space<vmem>>, vector<128x128xbf16>
    %cst_31 = arith.constant dense<0.000000e+00> : vector<16x128xf32>
    %65 = tpu.matmul %63, %64, %cst_31 {dimension_numbers = #tpu.dot_dimension_numbers<[1], [0], [0], [1], [0, 0, 1, 1], [], []>} : vector<16x128xbf16>, vector<128x128xbf16>, vector<16x128xf32> -> vector<16x128xf32>
    %c4 = arith.constant 4 : index
    %c0_32 = arith.constant 0 : index
    %66 = vector.load %arg3[%c4, %c0_32] : memref<8x128xf32, #tpu.memory_space<vmem>>, vector<1x128xf32>
    %67 = vector.broadcast %66 : vector<1x128xf32> to vector<16x128xf32>
    %68 = arith.addf %65, %67 : vector<16x128xf32>
    %cst_33 = arith.constant 3.000000e+00 : f32
    %69 = vector.broadcast %cst_33 : f32 to vector<16x128xf32>
    %70 = arith.addf %68, %69 : vector<16x128xf32>
    %cst_34 = arith.constant 0.000000e+00 : f32
    %71 = vector.broadcast %cst_34 : f32 to vector<16x128xf32>
    %72 = arith.maximumf %70, %71 : vector<16x128xf32>
    %cst_35 = arith.constant 6.000000e+00 : f32
    %73 = vector.broadcast %cst_35 : f32 to vector<16x128xf32>
    %74 = arith.minimumf %72, %73 : vector<16x128xf32>
    %75 = arith.mulf %74, %68 : vector<16x128xf32>
    %cst_36 = arith.constant 0.166666672 : f32
    %76 = vector.broadcast %cst_36 : f32 to vector<16x128xf32>
    %77 = arith.mulf %75, %76 : vector<16x128xf32>
    %78 = arith.addf %77, %62 : vector<16x128xf32>
    %79 = tpu.concatenate %15, %46, %78 in 1 : vector<16x128xf32>, vector<16x128xf32>, vector<16x128xf32> -> vector<16x384xf32>
    %80 = arith.truncf %79 : vector<16x384xf32> to vector<16x384xbf16>
    %c768 = arith.constant 768 : index
    %c0_37 = arith.constant 0 : index
    %81 = vector.load %arg2[%c768, %c0_37] : memref<1152x128xbf16, #tpu.memory_space<vmem>>, vector<384x128xbf16>
    %cst_38 = arith.constant dense<0.000000e+00> : vector<16x128xf32>
    %82 = tpu.matmul %80, %81, %cst_38 {dimension_numbers = #tpu.dot_dimension_numbers<[1], [0], [0], [1], [0, 0, 1, 1], [], []>} : vector<16x384xbf16>, vector<384x128xbf16>, vector<16x128xf32> -> vector<16x128xf32>
    %c5 = arith.constant 5 : index
    %c0_39 = arith.constant 0 : index
    %83 = vector.load %arg3[%c5, %c0_39] : memref<8x128xf32, #tpu.memory_space<vmem>>, vector<1x128xf32>
    %84 = vector.broadcast %83 : vector<1x128xf32> to vector<16x128xf32>
    %85 = arith.addf %82, %84 : vector<16x128xf32>
    %86 = math.tanh %85 : vector<16x128xf32>
    %c0_40 = arith.constant 0 : index
    %c0_41 = arith.constant 0 : index
    %87 = vector.load %arg4[%c0_40, %c0_41] : memref<16x128xf32, #tpu.memory_space<vmem>>, vector<16x128xf32>
    tpu.vector_store %arg4[%c0_40, %c0_41], %86 {strides = array<i32>} : memref<16x128xf32, #tpu.memory_space<vmem>>, vector<16x128xf32>,
    return
  }
  func.func @transform_0(%arg0: i32) -> (i32, i32) {
    %c0_i32 = arith.constant 0 : i32
    %c0_i32_0 = arith.constant 0 : i32
    return %arg0, %c0_i32 : i32, i32
  }
  func.func @transform_1(%arg0: i32) -> (i32, i32) {
    %c0_i32 = arith.constant 0 : i32
    %c0_i32_0 = arith.constant 0 : i32
    %c0_i32_1 = arith.constant 0 : i32
    return %c0_i32, %c0_i32_0 : i32, i32
  }
  func.func @transform_2(%arg0: i32) -> (i32, i32) {
    %c0_i32 = arith.constant 0 : i32
    %c0_i32_0 = arith.constant 0 : i32
    %c0_i32_1 = arith.constant 0 : i32
    return %c0_i32, %c0_i32_0 : i32, i32
  }
  func.func @transform_3(%arg0: i32) -> (i32, i32) {
    %c0_i32 = arith.constant 0 : i32
    %c0_i32_0 = arith.constant 0 : i32
    return %arg0, %c0_i32 : i32, i32
  }
}

</mosaic_0001>

<llo_original>
// kernel: tpu_custom_call.1
$region0: #{tpu_custom_call.1}
  #allocation0 [shape = 'u32[]', space=smem, size = 0x4, offset = 0x4, fixed_abs, tag = 'smem constant byte address 0x4 - core index']
  #allocation1 [shape = 'u32[144,128]{1,0:T(1,128)}', space=vmem, size = 0x12000, scoped, tag = 'internal scratch']
  %s0 = inlined_call_operand.hbm [shape: f32[16,16], index: 0, kind: input, shape index: {}]
  %s1 = inlined_call_operand.hbm [shape: bf16[1152,128], index: 1, kind: input, shape index: {}]
  %s2 = inlined_call_operand.hbm [shape: f32[8,128], index: 2, kind: input, shape index: {}]
  %s3 = inlined_call_operand.hbm [shape: f32[16,128], index: 3, kind: output, shape index: {}]
  %s4 = sld [smem:[#allocation0]]
  $region34: #{tpu_custom_call.1} parent=0
    _
  %s6 = ssub.s32 1, %s4
  %s7 = scalar_select 0, %s6, %s4
  $region1: #{tpu_custom_call.1} parent=0
    #allocation2 [shape = 'u8[8192]{0}', space=vmem, size = 0x2000, scoped, tag = 'input window, operand 0, single buffered']
    #allocation3 [shape = 's32[1]{0}', space=sflag, size = 0x4, scoped, tag = 'scoped memory for tpu_custom_call.1']
    #allocation4 [shape = 's32[1]{0}', space=sflag, size = 0x4, scoped, tag = 'scoped memory for tpu_custom_call.1']
    #allocation5 [shape = 'u8[294912]{0}', space=vmem, size = 0x48000, scoped, tag = 'input window, operand 1, single buffered']
    #allocation6 [shape = 's32[1]{0}', space=sflag, size = 0x4, scoped, tag = 'scoped memory for tpu_custom_call.1']
    #allocation7 [shape = 'u8[4096]{0}', space=vmem, size = 0x1000, scoped, tag = 'input window, operand 2, single buffered']
    #allocation8 [shape = 'u8[8192]{0}', space=vmem, size = 0x2000, scoped, tag = 'output window, operand 0, single buffered']
    %8 = vsyncpa [#allocation3], 0
    %9 = vsyncpa [#allocation6], 0
    %10 = vsyncpa [#allocation4], 0
    // Predicated region
    $region2: #{tpu_custom_call.1} parent=1 // pred_check
      _
    $region3: #{tpu_custom_call.1} parent=1 // pred_check_branch
      %12 = sbr.rel (0) target = $region5
    $region4: #{tpu_custom_call.1} parent=1 // pred_region
      %s14 = ssub.s32 256, 256
      %15 = vsyncadd [#allocation3], %s14
      %s16 = sshll.u32 [#allocation2], 4
      %s17 = int_to_ptr.vmem [resolvable:$true] %s16
      %22 = dma.hbm_to_vmem [thread:$0]  %s0, 256, %s17, [#allocation3], 128, 128, 8
    $region5: #{tpu_custom_call.1} parent=1 // pred_fallthru
      _
    // Predicated region
    $region6: #{tpu_custom_call.1} parent=1 // pred_check
      _
    $region7: #{tpu_custom_call.1} parent=1 // pred_check_branch
      %24 = sbr.rel (0) target = $region9
    $region8: #{tpu_custom_call.1} parent=1 // pred_region
      %s26 = ssub.s32 9216, 9216
      %27 = vsyncadd [#allocation6], %s26
      %s28 = sshll.u32 [#allocation5], 4
      %s29 = int_to_ptr.vmem [resolvable:$true] %s28
      %34 = dma.hbm_to_vmem [thread:$0]  %s1, 9216, %s29, [#allocation6], 64, 64, 4
    $region9: #{tpu_custom_call.1} parent=1 // pred_fallthru
      _
    // Predicated region
    $region10: #{tpu_custom_call.1} parent=1 // pred_check
      _
    $region11: #{tpu_custom_call.1} parent=1 // pred_check_branch
      %36 = sbr.rel (0) target = $region13
    $region12: #{tpu_custom_call.1} parent=1 // pred_region
      %s38 = ssub.s32 128, 128
      %39 = vsyncadd [#allocation6], %s38
      %s41 = sshll.u32 [#allocation7], 4
      %s42 = int_to_ptr.vmem [resolvable:$true] %s41
      %44 = dma.hbm_to_vmem [thread:$0]  %s2, 128, %s42, [#allocation6]
    $region13: #{tpu_custom_call.1} parent=1 // pred_fallthru
      _
    // Predicated region
    $region14: #{tpu_custom_call.1} parent=1 // pred_check
      _
    $region15: #{tpu_custom_call.1} parent=1 // pred_check_branch
      %46 = sbr.rel (0) target = $region17
    $region16: #{tpu_custom_call.1} parent=1 // pred_region
      %47 = dma.done [#allocation3], 256
    $region17: #{tpu_custom_call.1} parent=1 // pred_fallthru
      _
    // Predicated region
    $region18: #{tpu_custom_call.1} parent=1 // pred_check
      _
    $region19: #{tpu_custom_call.1} parent=1 // pred_check_branch
      %49 = sbr.rel (0) target = $region21
    $region20: #{tpu_custom_call.1} parent=1 // pred_region
      %50 = dma.done [#allocation6], 9216
    $region21: #{tpu_custom_call.1} parent=1 // pred_fallthru
      _
    // Predicated region
    $region22: #{tpu_custom_call.1} parent=1 // pred_check
      _
    $region23: #{tpu_custom_call.1} parent=1 // pred_check_branch
      %52 = sbr.rel (0) target = $region25
    $region24: #{tpu_custom_call.1} parent=1 // pred_region
      %53 = dma.done [#allocation6], 128
    $region25: #{tpu_custom_call.1} parent=1 // pred_fallthru
      _
    %v55 = vld [vmem:[#allocation2] sm:$0xff]
    %v56 = vld [vmem:[#allocation2 + $0x8] sm:$0xff]
    %v57 = vpack.c.bf16 %v56, %v55
    %v58 = vld [vmem:[#allocation5] sm:$0xf]
    %v59 = vld [vmem:[#allocation5 + $0x4] sm:$0xf]
    %v60 = vld [vmem:[#allocation7] sm:$0x1]
    %v61 = vlaneseq
    %v62 = vshrl.u32 %v61, 7
    %v63 = vsub.s32 0, %v62
    %v64 = vrot.slane %v60, %v63
    %v67 = vunpack.c.l.b16 %v58
    %v68 = vunpack.c.l.b16 %v59
    %v69 = vpack.c.b16 %v68, %v67
    %vm71 = vcmask 130048
    %v73 = vsel %vm71, %v57, 0
    %75 = vmatprep.subr.bf16.mxu0 0
    %76 = vmatpush1.bf16.msra.mxu0 %v69
    %77 = vmatprep.subr.bf16.mxu0 0
    %78 = vmatpush1.bf16.msra.mxu0 0
    %79 = vmatprep.subr.bf16.mxu0 0
    %80 = vmatpush1.bf16.msra.mxu0 0
    %81 = vmatprep.subr.bf16.mxu0 0
    %82 = vmatpush1.bf16.msra.mxu0 0
    %83 = vmatprep.subr.bf16.mxu0 0
    %84 = vmatpush1.bf16.msra.mxu0 0
    %85 = vmatprep.subr.bf16.mxu0 0
    %86 = vmatpush1.bf16.msra.mxu0 0
    %87 = vmatprep.subr.bf16.mxu0 0
    %88 = vmatpush1.bf16.msra.mxu0 0
    %89 = vmatprep.subr.bf16.mxu0 0
    %90 = vmatpush1.bf16.msra.mxu0 0
    %91 = vmatprep.subr.bf16.mxu0 0
    %92 = vmatpush1.bf16.msra.mxu0 0
    %93 = vmatprep.subr.bf16.mxu0 0
    %94 = vmatpush1.bf16.msra.mxu0 0
    %95 = vmatprep.subr.bf16.mxu0 0
    %96 = vmatpush1.bf16.msra.mxu0 0
    %97 = vmatprep.subr.bf16.mxu0 0
    %98 = vmatpush1.bf16.msra.mxu0 0
    %99 = vmatprep.subr.bf16.mxu0 0
    %100 = vmatpush1.bf16.msra.mxu0 0
    %101 = vmatprep.subr.bf16.mxu0 0
    %102 = vmatpush1.bf16.msra.mxu0 0
    %103 = vmatprep.subr.bf16.mxu0 0
    %104 = vmatpush1.bf16.msra.mxu0 0
    %105 = vmatprep.subr.bf16.mxu0 0
    %106 = vmatpush1.bf16.msra.mxu0 0
    %107 = vmatprep.mubr.bf16.mxu0 0
    %108 = vmatmul.mubr.bf16.gmra.mrb[0].mxu0 %v73
    %v109 = vpop.f32.mrb[0].mxu0
    %v110 = vadd.f32 %v64, %v109
    %v111 = vpop.f32.mrb[0].mxu0
    %v112 = vpop.f32.mrb[0].mxu0
    %v113 = vadd.f32 %v64, %v112
    %v114 = vpop.f32.mrb[0].mxu0
    %115 = vdwg.mxu0
    %v116 = vadd.f32 %v110, 3.0
    %v117 = vadd.f32 %v113, 3.0
    %v118 = vmax.f32 %v116, 0.0
    %v119 = vmax.f32 %v117, 0.0
    %v120 = vmin.f32 %v118, 6.0
    %v121 = vmin.f32 %v119, 6.0
    %v122 = vmul.f32 %v120, %v110
    %v123 = vmul.f32 %v121, %v113
    %v124 = vmul.f32 %v122, 0.16666667
    %v125 = vmul.f32 %v123, 0.16666667
    %v126 = vpack.c.bf16 %v125, %v124
    %v127 = vld [vmem:[#allocation5 + $0x40] sm:$0xf]
    %v128 = vld [vmem:[#allocation5 + $0x44] sm:$0xf]
    %v129 = vld [vmem:[#allocation5 + $0x48] sm:$0xf]
    %v130 = vld [vmem:[#allocation5 + $0x4c] sm:$0xf]
    %v131 = vld [vmem:[#allocation5 + $0x50] sm:$0xf]
    %v132 = vld [vmem:[#allocation5 + $0x54] sm:$0xf]
    %v133 = vld [vmem:[#allocation5 + $0x58] sm:$0xf]
    %v134 = vld [vmem:[#allocation5 + $0x5c] sm:$0xf]
    %v135 = vld [vmem:[#allocation5 + $0x60] sm:$0xf]
    %v136 = vld [vmem:[#allocation5 + $0x64] sm:$0xf]
    %v137 = vld [vmem:[#allocation5 + $0x68] sm:$0xf]
    %v138 = vld [vmem:[#allocation5 + $0x6c] sm:$0xf]
    %v139 = vld [vmem:[#allocation5 + $0x70] sm:$0xf]
    %v140 = vld [vmem:[#allocation5 + $0x74] sm:$0xf]
    %v141 = vld [vmem:[#allocation5 + $0x78] sm:$0xf]
    %v142 = vld [vmem:[#allocation5 + $0x7c] sm:$0xf]
    %v143 = vld [vmem:[#allocation7 + $0x1] sm:$0x1]
    %v144 = vlaneseq
    %v145 = vshrl.u32 %v144, 7
    %v146 = vsub.s32 0, %v145
    %v147 = vrot.slane %v143, %v146
    %v164 = vunpack.c.l.b16 %v127
    %v165 = vunpack.c.l.b16 %v128
    %v166 = vunpack.c.l.b16 %v129
    %v167 = vunpack.c.l.b16 %v130
    %v168 = vunpack.c.l.b16 %v131
    %v169 = vunpack.c.l.b16 %v132
    %v170 = vunpack.c.l.b16 %v133
    %v171 = vunpack.c.l.b16 %v134
    %v172 = vunpack.c.l.b16 %v135
    %v173 = vunpack.c.l.b16 %v136
    %v174 = vunpack.c.l.b16 %v137
    %v175 = vunpack.c.l.b16 %v138
    %v176 = vunpack.c.l.b16 %v139
    %v177 = vunpack.c.l.b16 %v140
    %v178 = vunpack.c.l.b16 %v141
    %v179 = vunpack.c.l.b16 %v142
    %v180 = vpack.c.b16 %v165, %v164
    %v181 = vpack.c.b16 %v167, %v166
    %v182 = vpack.c.b16 %v169, %v168
    %v183 = vpack.c.b16 %v171, %v170
    %v184 = vpack.c.b16 %v173, %v172
    %v185 = vpack.c.b16 %v175, %v174
    %v186 = vpack.c.b16 %v177, %v176
    %v187 = vpack.c.b16 %v179, %v178
    %196 = vmatprep.subr.bf16.mxu0 0
    %197 = vmatpush1.bf16.msra.mxu0 %v180
    %198 = vmatprep.subr.bf16.mxu0 0
    %199 = vmatpush1.bf16.msra.mxu0 %v181
    %200 = vmatprep.subr.bf16.mxu0 0
    %201 = vmatpush1.bf16.msra.mxu0 %v182
    %202 = vmatprep.subr.bf16.mxu0 0
    %203 = vmatpush1.bf16.msra.mxu0 %v183
    %204 = vmatprep.subr.bf16.mxu0 0
    %205 = vmatpush1.bf16.msra.mxu0 %v184
    %206 = vmatprep.subr.bf16.mxu0 0
    %207 = vmatpush1.bf16.msra.mxu0 %v185
    %208 = vmatprep.subr.bf16.mxu0 0
    %209 = vmatpush1.bf16.msra.mxu0 %v186
    %210 = vmatprep.subr.bf16.mxu0 0
    %211 = vmatpush1.bf16.msra.mxu0 %v187
    %212 = vmatprep.subr.bf16.mxu0 0
    %213 = vmatpush1.bf16.msra.mxu0 0
    %214 = vmatprep.subr.bf16.mxu0 0
    %215 = vmatpush1.bf16.msra.mxu0 0
    %216 = vmatprep.subr.bf16.mxu0 0
    %217 = vmatpush1.bf16.msra.mxu0 0
    %218 = vmatprep.subr.bf16.mxu0 0
    %219 = vmatpush1.bf16.msra.mxu0 0
    %220 = vmatprep.subr.bf16.mxu0 0
    %221 = vmatpush1.bf16.msra.mxu0 0
    %222 = vmatprep.subr.bf16.mxu0 0
    %223 = vmatpush1.bf16.msra.mxu0 0
    %224 = vmatprep.subr.bf16.mxu0 0
    %225 = vmatpush1.bf16.msra.mxu0 0
    %226 = vmatprep.subr.bf16.mxu0 0
    %227 = vmatpush1.bf16.msra.mxu0 0
    %228 = vmatprep.mubr.bf16.mxu0 0
    %229 = vmatmul.mubr.bf16.gmra.mrb[0].mxu0 %v126
    %v230 = vpop.f32.mrb[0].mxu0
    %v231 = vadd.f32 %v147, %v230
    %v232 = vpop.f32.mrb[0].mxu0
    %v233 = vpop.f32.mrb[0].mxu0
    %v234 = vadd.f32 %v147, %v233
    %v235 = vpop.f32.mrb[0].mxu0
    %236 = vdwg.mxu0
    %v237 = vadd.f32 %v231, 3.0
    %v238 = vadd.f32 %v234, 3.0
    %v239 = vmax.f32 %v237, 0.0
    %v240 = vmax.f32 %v238, 0.0
    %v241 = vmin.f32 %v239, 6.0
    %v242 = vmin.f32 %v240, 6.0
    %v243 = vmul.f32 %v241, %v231
    %v244 = vmul.f32 %v242, %v234
    %v245 = vmul.f32 %v243, 0.16666667
    %v246 = vmul.f32 %v244, 0.16666667
    %v247 = vpack.c.bf16 %v246, %v245
    %v248 = vld [vmem:[#allocation5 + $0x80] sm:$0xf]
    %v249 = vld [vmem:[#allocation5 + $0x84] sm:$0xf]
    %v250 = vld [vmem:[#allocation5 + $0x88] sm:$0xf]
    %v251 = vld [vmem:[#allocation5 + $0x8c] sm:$0xf]
    %v252 = vld [vmem:[#allocation5 + $0x90] sm:$0xf]
    %v253 = vld [vmem:[#allocation5 + $0x94] sm:$0xf]
    %v254 = vld [vmem:[#allocation5 + $0x98] sm:$0xf]
    %v255 = vld [vmem:[#allocation5 + $0x9c] sm:$0xf]
    %v256 = vld [vmem:[#allocation5 + $0xa0] sm:$0xf]
    %v257 = vld [vmem:[#allocation5 + $0xa4] sm:$0xf]
    %v258 = vld [vmem:[#allocation5 + $0xa8] sm:$0xf]
    %v259 = vld [vmem:[#allocation5 + $0xac] sm:$0xf]
    %v260 = vld [vmem:[#allocation5 + $0xb0] sm:$0xf]
    %v261 = vld [vmem:[#allocation5 + $0xb4] sm:$0xf]
    %v262 = vld [vmem:[#allocation5 + $0xb8] sm:$0xf]
    %v263 = vld [vmem:[#allocation5 + $0xbc] sm:$0xf]
    %v264 = vld [vmem:[#allocation7 + $0x2] sm:$0x1]
    %v265 = vlaneseq
    %v266 = vshrl.u32 %v265, 7
    %v267 = vsub.s32 0, %v266
    %v268 = vrot.slane %v264, %v267
    %v285 = vunpack.c.l.b16 %v248
    %v286 = vunpack.c.l.b16 %v249
    %v287 = vunpack.c.l.b16 %v250
    %v288 = vunpack.c.l.b16 %v251
    %v289 = vunpack.c.l.b16 %v252
    %v290 = vunpack.c.l.b16 %v253
    %v291 = vunpack.c.l.b16 %v254
    %v292 = vunpack.c.l.b16 %v255
    %v293 = vunpack.c.l.b16 %v256
    %v294 = vunpack.c.l.b16 %v257
    %v295 = vunpack.c.l.b16 %v258
    %v296 = vunpack.c.l.b16 %v259
    %v297 = vunpack.c.l.b16 %v260
    %v298 = vunpack.c.l.b16 %v261
    %v299 = vunpack.c.l.b16 %v262
    %v300 = vunpack.c.l.b16 %v263
    %v301 = vpack.c.b16 %v286, %v285
    %v302 = vpack.c.b16 %v288, %v287
    %v303 = vpack.c.b16 %v290, %v289
    %v304 = vpack.c.b16 %v292, %v291
    %v305 = vpack.c.b16 %v294, %v293
    %v306 = vpack.c.b16 %v296, %v295
    %v307 = vpack.c.b16 %v298, %v297
    %v308 = vpack.c.b16 %v300, %v299
    %317 = vmatprep.subr.bf16.mxu0 0
    %318 = vmatpush1.bf16.msra.mxu0 %v301
    %319 = vmatprep.subr.bf16.mxu0 0
    %320 = vmatpush1.bf16.msra.mxu0 %v302
    %321 = vmatprep.subr.bf16.mxu0 0
    %322 = vmatpush1.bf16.msra.mxu0 %v303
    %323 = vmatprep.subr.bf16.mxu0 0
    %324 = vmatpush1.bf16.msra.mxu0 %v304
    %325 = vmatprep.subr.bf16.mxu0 0
    %326 = vmatpush1.bf16.msra.mxu0 %v305
    %327 = vmatprep.subr.bf16.mxu0 0
    %328 = vmatpush1.bf16.msra.mxu0 %v306
    %329 = vmatprep.subr.bf16.mxu0 0
    %330 = vmatpush1.bf16.msra.mxu0 %v307
    %331 = vmatprep.subr.bf16.mxu0 0
    %332 = vmatpush1.bf16.msra.mxu0 %v308
    %333 = vmatprep.subr.bf16.mxu0 0
    %334 = vmatpush1.bf16.msra.mxu0 0
    %335 = vmatprep.subr.bf16.mxu0 0
    %336 = vmatpush1.bf16.msra.mxu0 0
    %337 = vmatprep.subr.bf16.mxu0 0
    %338 = vmatpush1.bf16.msra.mxu0 0
    %339 = vmatprep.subr.bf16.mxu0 0
    %340 = vmatpush1.bf16.msra.mxu0 0
    %341 = vmatprep.subr.bf16.mxu0 0
    %342 = vmatpush1.bf16.msra.mxu0 0
    %343 = vmatprep.subr.bf16.mxu0 0
    %344 = vmatpush1.bf16.msra.mxu0 0
    %345 = vmatprep.subr.bf16.mxu0 0
    %346 = vmatpush1.bf16.msra.mxu0 0
    %347 = vmatprep.subr.bf16.mxu0 0
    %348 = vmatpush1.bf16.msra.mxu0 0
    %349 = vmatprep.mubr.bf16.mxu0 0
    %350 = vmatmul.mubr.bf16.gmra.mrb[0].mxu0 %v247
    %v351 = vpop.f32.mrb[0].mxu0
    %v352 = vadd.f32 %v268, %v351
    %v353 = vpop.f32.mrb[0].mxu0
    %v354 = vpop.f32.mrb[0].mxu0
    %v355 = vadd.f32 %v268, %v354
    %v356 = vpop.f32.mrb[0].mxu0
    %357 = vdwg.mxu0
    %v358 = vadd.f32 %v352, 3.0
    %v359 = vadd.f32 %v355, 3.0
    %v360 = vmax.f32 %v358, 0.0
    %v361 = vmax.f32 %v359, 0.0
    %v362 = vmin.f32 %v360, 6.0
    %v363 = vmin.f32 %v361, 6.0
    %v364 = vmul.f32 %v362, %v352
    %v365 = vmul.f32 %v363, %v355
    %v366 = vmul.f32 %v364, 0.16666667
    %v367 = vmul.f32 %v365, 0.16666667
    %v368 = vadd.f32 %v366, %v245
    %v369 = vadd.f32 %v367, %v246
    %v370 = vpack.c.bf16 %v369, %v368
    %v371 = vld [vmem:[#allocation5 + $0xc0] sm:$0xf]
    %v372 = vld [vmem:[#allocation5 + $0xc4] sm:$0xf]
    %v373 = vld [vmem:[#allocation5 + $0xc8] sm:$0xf]
    %v374 = vld [vmem:[#allocation5 + $0xcc] sm:$0xf]
    %v375 = vld [vmem:[#allocation5 + $0xd0] sm:$0xf]
    %v376 = vld [vmem:[#allocation5 + $0xd4] sm:$0xf]
    %v377 = vld [vmem:[#allocation5 + $0xd8] sm:$0xf]
    %v378 = vld [vmem:[#allocation5 + $0xdc] sm:$0xf]
    %v379 = vld [vmem:[#allocation5 + $0xe0] sm:$0xf]
    %v380 = vld [vmem:[#allocation5 + $0xe4] sm:$0xf]
    %v381 = vld [vmem:[#allocation5 + $0xe8] sm:$0xf]
    %v382 = vld [vmem:[#allocation5 + $0xec] sm:$0xf]
    %v383 = vld [vmem:[#allocation5 + $0xf0] sm:$0xf]
    %v384 = vld [vmem:[#allocation5 + $0xf4] sm:$0xf]
    %v385 = vld [vmem:[#allocation5 + $0xf8] sm:$0xf]
    %v386 = vld [vmem:[#allocation5 + $0xfc] sm:$0xf]
    %v387 = vld [vmem:[#allocation5 + $0x100] sm:$0xf]
    %v388 = vld [vmem:[#allocation5 + $0x104] sm:$0xf]
    %v389 = vld [vmem:[#allocation5 + $0x108] sm:$0xf]
    %v390 = vld [vmem:[#allocation5 + $0x10c] sm:$0xf]
    %v391 = vld [vmem:[#allocation5 + $0x110] sm:$0xf]
    %v392 = vld [vmem:[#allocation5 + $0x114] sm:$0xf]
    %v393 = vld [vmem:[#allocation5 + $0x118] sm:$0xf]
    %v394 = vld [vmem:[#allocation5 + $0x11c] sm:$0xf]
    %v395 = vld [vmem:[#allocation5 + $0x120] sm:$0xf]
    %v396 = vld [vmem:[#allocation5 + $0x124] sm:$0xf]
    %v397 = vld [vmem:[#allocation5 + $0x128] sm:$0xf]
    %v398 = vld [vmem:[#allocation5 + $0x12c] sm:$0xf]
    %v399 = vld [vmem:[#allocation5 + $0x130] sm:$0xf]
    %v400 = vld [vmem:[#allocation5 + $0x134] sm:$0xf]
    %v401 = vld [vmem:[#allocation5 + $0x138] sm:$0xf]
    %v402 = vld [vmem:[#allocation5 + $0x13c] sm:$0xf]
    %v403 = vld [vmem:[#allocation7 + $0x3] sm:$0x1]
    %v404 = vlaneseq
    %v405 = vshrl.u32 %v404, 7
    %v406 = vsub.s32 0, %v405
    %v407 = vrot.slane %v403, %v406
    %v440 = vunpack.c.l.b16 %v371
    %v441 = vunpack.c.l.b16 %v372
    %v442 = vunpack.c.l.b16 %v373
    %v443 = vunpack.c.l.b16 %v374
    %v444 = vunpack.c.l.b16 %v375
    %v445 = vunpack.c.l.b16 %v376
    %v446 = vunpack.c.l.b16 %v377
    %v447 = vunpack.c.l.b16 %v378
    %v448 = vunpack.c.l.b16 %v379
    %v449 = vunpack.c.l.b16 %v380
    %v450 = vunpack.c.l.b16 %v381
    %v451 = vunpack.c.l.b16 %v382
    %v452 = vunpack.c.l.b16 %v383
    %v453 = vunpack.c.l.b16 %v384
    %v454 = vunpack.c.l.b16 %v385
    %v455 = vunpack.c.l.b16 %v386
    %v456 = vunpack.c.l.b16 %v387
    %v457 = vunpack.c.l.b16 %v388
    %v458 = vunpack.c.l.b16 %v389
    %v459 = vunpack.c.l.b16 %v390
    %v460 = vunpack.c.l.b16 %v391
    %v461 = vunpack.c.l.b16 %v392
    %v462 = vunpack.c.l.b16 %v393
    %v463 = vunpack.c.l.b16 %v394
    %v464 = vunpack.c.l.b16 %v395
    %v465 = vunpack.c.l.b16 %v396
    %v466 = vunpack.c.l.b16 %v397
    %v467 = vunpack.c.l.b16 %v398
    %v468 = vunpack.c.l.b16 %v399
    %v469 = vunpack.c.l.b16 %v400
    %v470 = vunpack.c.l.b16 %v401
    %v471 = vunpack.c.l.b16 %v402
    %v472 = vpack.c.b16 %v441, %v440
    %v473 = vpack.c.b16 %v443, %v442
    %v474 = vpack.c.b16 %v445, %v444
    %v475 = vpack.c.b16 %v447, %v446
    %v476 = vpack.c.b16 %v449, %v448
    %v477 = vpack.c.b16 %v451, %v450
    %v478 = vpack.c.b16 %v453, %v452
    %v479 = vpack.c.b16 %v455, %v454
    %v480 = vpack.c.b16 %v457, %v456
    %v481 = vpack.c.b16 %v459, %v458
    %v482 = vpack.c.b16 %v461, %v460
    %v483 = vpack.c.b16 %v463, %v462
    %v484 = vpack.c.b16 %v465, %v464
    %v485 = vpack.c.b16 %v467, %v466
    %v486 = vpack.c.b16 %v469, %v468
    %v487 = vpack.c.b16 %v471, %v470
    %504 = vmatprep.subr.bf16.mxu0 0
    %505 = vmatpush1.bf16.msra.mxu0 %v472
    %506 = vmatprep.subr.bf16.mxu0 0
    %507 = vmatpush1.bf16.msra.mxu0 %v473
    %508 = vmatprep.subr.bf16.mxu0 0
    %509 = vmatpush1.bf16.msra.mxu0 %v474
    %510 = vmatprep.subr.bf16.mxu0 0
    %511 = vmatpush1.bf16.msra.mxu0 %v475
    %512 = vmatprep.subr.bf16.mxu0 0
    %513 = vmatpush1.bf16.msra.mxu0 %v476
    %514 = vmatprep.subr.bf16.mxu0 0
    %515 = vmatpush1.bf16.msra.mxu0 %v477
    %516 = vmatprep.subr.bf16.mxu0 0
    %517 = vmatpush1.bf16.msra.mxu0 %v478
    %518 = vmatprep.subr.bf16.mxu0 0
    %519 = vmatpush1.bf16.msra.mxu0 %v479
    %520 = vmatprep.subr.bf16.mxu0 0
    %521 = vmatpush1.bf16.msra.mxu0 %v480
    %522 = vmatprep.subr.bf16.mxu0 0
    %523 = vmatpush1.bf16.msra.mxu0 %v481
    %524 = vmatprep.subr.bf16.mxu0 0
    %525 = vmatpush1.bf16.msra.mxu0 %v482
    %526 = vmatprep.subr.bf16.mxu0 0
    %527 = vmatpush1.bf16.msra.mxu0 %v483
    %528 = vmatprep.subr.bf16.mxu0 0
    %529 = vmatpush1.bf16.msra.mxu0 %v484
    %530 = vmatprep.subr.bf16.mxu0 0
    %531 = vmatpush1.bf16.msra.mxu0 %v485
    %532 = vmatprep.subr.bf16.mxu0 0
    %533 = vmatpush1.bf16.msra.mxu0 %v486
    %534 = vmatprep.subr.bf16.mxu0 0
    %535 = vmatpush1.bf16.msra.mxu0 %v487
    %536 = vmatprep.mubr.bf16.mxu0 %v370
    %537 = vmatmul.mubr.bf16.gmra.mrb[0].mxu0 %v126
    %v538 = vpop.f32.mrb[0].mxu0
    %v539 = vadd.f32 %v407, %v538
    %v540 = vpop.f32.mrb[0].mxu0
    %v541 = vpop.f32.mrb[0].mxu0
    %v542 = vadd.f32 %v407, %v541
    %v543 = vpop.f32.mrb[0].mxu0
    %544 = vdwg.mxu0
    %v545 = vadd.f32 %v539, 3.0
    %v546 = vadd.f32 %v542, 3.0
    %v547 = vmax.f32 %v545, 0.0
    %v548 = vmax.f32 %v546, 0.0
    %v549 = vmin.f32 %v547, 6.0
    %v550 = vmin.f32 %v548, 6.0
    %v551 = vmul.f32 %v549, %v539
    %v552 = vmul.f32 %v550, %v542
    %v553 = vmul.f32 %v551, 0.16666667
    %v554 = vmul.f32 %v552, 0.16666667
    %v555 = vpack.c.bf16 %v554, %v553
    %v556 = vld [vmem:[#allocation5 + $0x140] sm:$0xf]
    %v557 = vld [vmem:[#allocation5 + $0x144] sm:$0xf]
    %v558 = vld [vmem:[#allocation5 + $0x148] sm:$0xf]
    %v559 = vld [vmem:[#allocation5 + $0x14c] sm:$0xf]
    %v560 = vld [vmem:[#allocation5 + $0x150] sm:$0xf]
    %v561 = vld [vmem:[#allocation5 + $0x154] sm:$0xf]
    %v562 = vld [vmem:[#allocation5 + $0x158] sm:$0xf]
    %v563 = vld [vmem:[#allocation5 + $0x15c] sm:$0xf]
    %v564 = vld [vmem:[#allocation5 + $0x160] sm:$0xf]
    %v565 = vld [vmem:[#allocation5 + $0x164] sm:$0xf]
    %v566 = vld [vmem:[#allocation5 + $0x168] sm:$0xf]
    %v567 = vld [vmem:[#allocation5 + $0x16c] sm:$0xf]
    %v568 = vld [vmem:[#allocation5 + $0x170] sm:$0xf]
    %v569 = vld [vmem:[#allocation5 + $0x174] sm:$0xf]
    %v570 = vld [vmem:[#allocation5 + $0x178] sm:$0xf]
    %v571 = vld [vmem:[#allocation5 + $0x17c] sm:$0xf]
    %v572 = vld [vmem:[#allocation7 + $0x4] sm:$0x1]
    %v573 = vlaneseq
    %v574 = vshrl.u32 %v573, 7
    %v575 = vsub.s32 0, %v574
    %v576 = vrot.slane %v572, %v575
    %v593 = vunpack.c.l.b16 %v556
    %v594 = vunpack.c.l.b16 %v557
    %v595 = vunpack.c.l.b16 %v558
    %v596 = vunpack.c.l.b16 %v559
    %v597 = vunpack.c.l.b16 %v560
    %v598 = vunpack.c.l.b16 %v561
    %v599 = vunpack.c.l.b16 %v562
    %v600 = vunpack.c.l.b16 %v563
    %v601 = vunpack.c.l.b16 %v564
    %v602 = vunpack.c.l.b16 %v565
    %v603 = vunpack.c.l.b16 %v566
    %v604 = vunpack.c.l.b16 %v567
    %v605 = vunpack.c.l.b16 %v568
    %v606 = vunpack.c.l.b16 %v569
    %v607 = vunpack.c.l.b16 %v570
    %v608 = vunpack.c.l.b16 %v571
    %v609 = vpack.c.b16 %v594, %v593
    %v610 = vpack.c.b16 %v596, %v595
    %v611 = vpack.c.b16 %v598, %v597
    %v612 = vpack.c.b16 %v600, %v599
    %v613 = vpack.c.b16 %v602, %v601
    %v614 = vpack.c.b16 %v604, %v603
    %v615 = vpack.c.b16 %v606, %v605
    %v616 = vpack.c.b16 %v608, %v607
    %625 = vmatprep.subr.bf16.mxu0 0
    %626 = vmatpush1.bf16.msra.mxu0 %v609
    %627 = vmatprep.subr.bf16.mxu0 0
    %628 = vmatpush1.bf16.msra.mxu0 %v610
    %629 = vmatprep.subr.bf16.mxu0 0
    %630 = vmatpush1.bf16.msra.mxu0 %v611
    %631 = vmatprep.subr.bf16.mxu0 0
    %632 = vmatpush1.bf16.msra.mxu0 %v612
    %633 = vmatprep.subr.bf16.mxu0 0
    %634 = vmatpush1.bf16.msra.mxu0 %v613
    %635 = vmatprep.subr.bf16.mxu0 0
    %636 = vmatpush1.bf16.msra.mxu0 %v614
    %637 = vmatprep.subr.bf16.mxu0 0
    %638 = vmatpush1.bf16.msra.mxu0 %v615
    %639 = vmatprep.subr.bf16.mxu0 0
    %640 = vmatpush1.bf16.msra.mxu0 %v616
    %641 = vmatprep.subr.bf16.mxu0 0
    %642 = vmatpush1.bf16.msra.mxu0 0
    %643 = vmatprep.subr.bf16.mxu0 0
    %644 = vmatpush1.bf16.msra.mxu0 0
    %645 = vmatprep.subr.bf16.mxu0 0
    %646 = vmatpush1.bf16.msra.mxu0 0
    %647 = vmatprep.subr.bf16.mxu0 0
    %648 = vmatpush1.bf16.msra.mxu0 0
    %649 = vmatprep.subr.bf16.mxu0 0
    %650 = vmatpush1.bf16.msra.mxu0 0
    %651 = vmatprep.subr.bf16.mxu0 0
    %652 = vmatpush1.bf16.msra.mxu0 0
    %653 = vmatprep.subr.bf16.mxu0 0
    %654 = vmatpush1.bf16.msra.mxu0 0
    %655 = vmatprep.subr.bf16.mxu0 0
    %656 = vmatpush1.bf16.msra.mxu0 0
    %657 = vmatprep.mubr.bf16.mxu0 0
    %658 = vmatmul.mubr.bf16.gmra.mrb[0].mxu0 %v555
    %v659 = vpop.f32.mrb[0].mxu0
    %v660 = vadd.f32 %v576, %v659
    %v661 = vpop.f32.mrb[0].mxu0
    %v662 = vpop.f32.mrb[0].mxu0
    %v663 = vadd.f32 %v576, %v662
    %v664 = vpop.f32.mrb[0].mxu0
    %665 = vdwg.mxu0
    %v666 = vadd.f32 %v660, 3.0
    %v667 = vadd.f32 %v663, 3.0
    %v668 = vmax.f32 %v666, 0.0
    %v669 = vmax.f32 %v667, 0.0
    %v670 = vmin.f32 %v668, 6.0
    %v671 = vmin.f32 %v669, 6.0
    %v672 = vmul.f32 %v670, %v660
    %v673 = vmul.f32 %v671, %v663
    %v674 = vmul.f32 %v672, 0.16666667
    %v675 = vmul.f32 %v673, 0.16666667
    %v676 = vadd.f32 %v674, %v553
    %v677 = vadd.f32 %v675, %v554
    %v678 = vpack.c.bf16 %v677, %v676
    %v679 = vld [vmem:[#allocation5 + $0x180] sm:$0xf]
    %v680 = vld [vmem:[#allocation5 + $0x184] sm:$0xf]
    %v681 = vld [vmem:[#allocation5 + $0x188] sm:$0xf]
    %v682 = vld [vmem:[#allocation5 + $0x18c] sm:$0xf]
    %v683 = vld [vmem:[#allocation5 + $0x190] sm:$0xf]
    %v684 = vld [vmem:[#allocation5 + $0x194] sm:$0xf]
    %v685 = vld [vmem:[#allocation5 + $0x198] sm:$0xf]
    %v686 = vld [vmem:[#allocation5 + $0x19c] sm:$0xf]
    %v687 = vld [vmem:[#allocation5 + $0x1a0] sm:$0xf]
    %v688 = vld [vmem:[#allocation5 + $0x1a4] sm:$0xf]
    %v689 = vld [vmem:[#allocation5 + $0x1a8] sm:$0xf]
    %v690 = vld [vmem:[#allocation5 + $0x1ac] sm:$0xf]
    %v691 = vld [vmem:[#allocation5 + $0x1b0] sm:$0xf]
    %v692 = vld [vmem:[#allocation5 + $0x1b4] sm:$0xf]
    %v693 = vld [vmem:[#allocation5 + $0x1b8] sm:$0xf]
    %v694 = vld [vmem:[#allocation5 + $0x1bc] sm:$0xf]
    %v695 = vld [vmem:[#allocation5 + $0x1c0] sm:$0xf]
    %v696 = vld [vmem:[#allocation5 + $0x1c4] sm:$0xf]
    %v697 = vld [vmem:[#allocation5 + $0x1c8] sm:$0xf]
    %v698 = vld [vmem:[#allocation5 + $0x1cc] sm:$0xf]
    %v699 = vld [vmem:[#allocation5 + $0x1d0] sm:$0xf]
    %v700 = vld [vmem:[#allocation5 + $0x1d4] sm:$0xf]
    %v701 = vld [vmem:[#allocation5 + $0x1d8] sm:$0xf]
    %v702 = vld [vmem:[#allocation5 + $0x1dc] sm:$0xf]
    %v703 = vld [vmem:[#allocation5 + $0x1e0] sm:$0xf]
    %v704 = vld [vmem:[#allocation5 + $0x1e4] sm:$0xf]
    %v705 = vld [vmem:[#allocation5 + $0x1e8] sm:$0xf]
    %v706 = vld [vmem:[#allocation5 + $0x1ec] sm:$0xf]
    %v707 = vld [vmem:[#allocation5 + $0x1f0] sm:$0xf]
    %v708 = vld [vmem:[#allocation5 + $0x1f4] sm:$0xf]
    %v709 = vld [vmem:[#allocation5 + $0x1f8] sm:$0xf]
    %v710 = vld [vmem:[#allocation5 + $0x1fc] sm:$0xf]
    %v711 = vld [vmem:[#allocation5 + $0x200] sm:$0xf]
    %v712 = vld [vmem:[#allocation5 + $0x204] sm:$0xf]
    %v713 = vld [vmem:[#allocation5 + $0x208] sm:$0xf]
    %v714 = vld [vmem:[#allocation5 + $0x20c] sm:$0xf]
    %v715 = vld [vmem:[#allocation5 + $0x210] sm:$0xf]
    %v716 = vld [vmem:[#allocation5 + $0x214] sm:$0xf]
    %v717 = vld [vmem:[#allocation5 + $0x218] sm:$0xf]
    %v718 = vld [vmem:[#allocation5 + $0x21c] sm:$0xf]
    %v719 = vld [vmem:[#allocation5 + $0x220] sm:$0xf]
    %v720 = vld [vmem:[#allocation5 + $0x224] sm:$0xf]
    %v721 = vld [vmem:[#allocation5 + $0x228] sm:$0xf]
    %v722 = vld [vmem:[#allocation5 + $0x22c] sm:$0xf]
    %v723 = vld [vmem:[#allocation5 + $0x230] sm:$0xf]
    %v724 = vld [vmem:[#allocation5 + $0x234] sm:$0xf]
    %v725 = vld [vmem:[#allocation5 + $0x238] sm:$0xf]
    %v726 = vld [vmem:[#allocation5 + $0x23c] sm:$0xf]
    %v727 = vld [vmem:[#allocation7 + $0x5] sm:$0x1]
    %v728 = vlaneseq
    %v729 = vshrl.u32 %v728, 7
    %v730 = vsub.s32 0, %v729
    %v731 = vrot.slane %v727, %v730
    %v780 = vunpack.c.l.b16 %v679
    %v781 = vunpack.c.l.b16 %v680
    %v782 = vunpack.c.l.b16 %v681
    %v783 = vunpack.c.l.b16 %v682
    %v784 = vunpack.c.l.b16 %v683
    %v785 = vunpack.c.l.b16 %v684
    %v786 = vunpack.c.l.b16 %v685
    %v787 = vunpack.c.l.b16 %v686
    %v788 = vunpack.c.l.b16 %v687
    %v789 = vunpack.c.l.b16 %v688
    %v790 = vunpack.c.l.b16 %v689
    %v791 = vunpack.c.l.b16 %v690
    %v792 = vunpack.c.l.b16 %v691
    %v793 = vunpack.c.l.b16 %v692
    %v794 = vunpack.c.l.b16 %v693
    %v795 = vunpack.c.l.b16 %v694
    %v796 = vunpack.c.l.b16 %v695
    %v797 = vunpack.c.l.b16 %v696
    %v798 = vunpack.c.l.b16 %v697
    %v799 = vunpack.c.l.b16 %v698
    %v800 = vunpack.c.l.b16 %v699
    %v801 = vunpack.c.l.b16 %v700
    %v802 = vunpack.c.l.b16 %v701
    %v803 = vunpack.c.l.b16 %v702
    %v804 = vunpack.c.l.b16 %v703
    %v805 = vunpack.c.l.b16 %v704
    %v806 = vunpack.c.l.b16 %v705
    %v807 = vunpack.c.l.b16 %v706
    %v808 = vunpack.c.l.b16 %v707
    %v809 = vunpack.c.l.b16 %v708
    %v810 = vunpack.c.l.b16 %v709
    %v811 = vunpack.c.l.b16 %v710
    %v812 = vunpack.c.l.b16 %v711
    %v813 = vunpack.c.l.b16 %v712
    %v814 = vunpack.c.l.b16 %v713
    %v815 = vunpack.c.l.b16 %v714
    %v816 = vunpack.c.l.b16 %v715
    %v817 = vunpack.c.l.b16 %v716
    %v818 = vunpack.c.l.b16 %v717
    %v819 = vunpack.c.l.b16 %v718
    %v820 = vunpack.c.l.b16 %v719
    %v821 = vunpack.c.l.b16 %v720
    %v822 = vunpack.c.l.b16 %v721
    %v823 = vunpack.c.l.b16 %v722
    %v824 = vunpack.c.l.b16 %v723
    %v825 = vunpack.c.l.b16 %v724
    %v826 = vunpack.c.l.b16 %v725
    %v827 = vunpack.c.l.b16 %v726
    %v828 = vpack.c.b16 %v781, %v780
    %v829 = vpack.c.b16 %v783, %v782
    %v830 = vpack.c.b16 %v785, %v784
    %v831 = vpack.c.b16 %v787, %v786
    %v832 = vpack.c.b16 %v789, %v788
    %v833 = vpack.c.b16 %v791, %v790
    %v834 = vpack.c.b16 %v793, %v792
    %v835 = vpack.c.b16 %v795, %v794
    %v836 = vpack.c.b16 %v797, %v796
    %v837 = vpack.c.b16 %v799, %v798
    %v838 = vpack.c.b16 %v801, %v800
    %v839 = vpack.c.b16 %v803, %v802
    %v840 = vpack.c.b16 %v805, %v804
    %v841 = vpack.c.b16 %v807, %v806
    %v842 = vpack.c.b16 %v809, %v808
    %v843 = vpack.c.b16 %v811, %v810
    %v844 = vpack.c.b16 %v813, %v812
    %v845 = vpack.c.b16 %v815, %v814
    %v846 = vpack.c.b16 %v817, %v816
    %v847 = vpack.c.b16 %v819, %v818
    %v848 = vpack.c.b16 %v821, %v820
    %v849 = vpack.c.b16 %v823, %v822
    %v850 = vpack.c.b16 %v825, %v824
    %v851 = vpack.c.b16 %v827, %v826
    %876 = vmatprep.subr.bf16.mxu0 0
    %877 = vmatpush1.bf16.msra.mxu0 %v828
    %878 = vmatprep.subr.bf16.mxu0 0
    %879 = vmatpush1.bf16.msra.mxu0 %v829
    %880 = vmatprep.subr.bf16.mxu0 0
    %881 = vmatpush1.bf16.msra.mxu0 %v830
    %882 = vmatprep.subr.bf16.mxu0 0
    %883 = vmatpush1.bf16.msra.mxu0 %v831
    %884 = vmatprep.subr.bf16.mxu0 0
    %885 = vmatpush1.bf16.msra.mxu0 %v832
    %886 = vmatprep.subr.bf16.mxu0 0
    %887 = vmatpush1.bf16.msra.mxu0 %v833
    %888 = vmatprep.subr.bf16.mxu0 0
    %889 = vmatpush1.bf16.msra.mxu0 %v834
    %890 = vmatprep.subr.bf16.mxu0 0
    %891 = vmatpush1.bf16.msra.mxu0 %v835
    %892 = vmatprep.subr.bf16.mxu0 0
    %893 = vmatpush1.bf16.msra.mxu0 %v836
    %894 = vmatprep.subr.bf16.mxu0 0
    %895 = vmatpush1.bf16.msra.mxu0 %v837
    %896 = vmatprep.subr.bf16.mxu0 0
    %897 = vmatpush1.bf16.msra.mxu0 %v838
    %898 = vmatprep.subr.bf16.mxu0 0
    %899 = vmatpush1.bf16.msra.mxu0 %v839
    %900 = vmatprep.subr.bf16.mxu0 0
    %901 = vmatpush1.bf16.msra.mxu0 %v840
    %902 = vmatprep.subr.bf16.mxu0 0
    %903 = vmatpush1.bf16.msra.mxu0 %v841
    %904 = vmatprep.subr.bf16.mxu0 0
    %905 = vmatpush1.bf16.msra.mxu0 %v842
    %906 = vmatprep.subr.bf16.mxu0 0
    %907 = vmatpush1.bf16.msra.mxu0 %v843
    %908 = vmatprep.mubr.bf16.mxu0 %v370
    %909 = vmatmul.mubr.bf16.gmra.mrb[0].mxu0 %v126
    %v910 = vpop.f32.mrb[0].mxu0
    %v911 = vadd.f32 %v731, %v910
    %v912 = vpop.f32.mrb[0].mxu0
    %v913 = vpop.f32.mrb[0].mxu0
    %v914 = vadd.f32 %v731, %v913
    %v915 = vpop.f32.mrb[0].mxu0
    %916 = vdwg.mxu0
    %917 = vmatprep.subr.bf16.mxu0 0
    %918 = vmatpush1.bf16.msra.mxu0 %v844
    %919 = vmatprep.subr.bf16.mxu0 0
    %920 = vmatpush1.bf16.msra.mxu0 %v845
    %921 = vmatprep.subr.bf16.mxu0 0
    %922 = vmatpush1.bf16.msra.mxu0 %v846
    %923 = vmatprep.subr.bf16.mxu0 0
    %924 = vmatpush1.bf16.msra.mxu0 %v847
    %925 = vmatprep.subr.bf16.mxu0 0
    %926 = vmatpush1.bf16.msra.mxu0 %v848
    %927 = vmatprep.subr.bf16.mxu0 0
    %928 = vmatpush1.bf16.msra.mxu0 %v849
    %929 = vmatprep.subr.bf16.mxu0 0
    %930 = vmatpush1.bf16.msra.mxu0 %v850
    %931 = vmatprep.subr.bf16.mxu0 0
    %932 = vmatpush1.bf16.msra.mxu0 %v851
    %933 = vmatprep.subr.bf16.mxu0 0
    %934 = vmatpush1.bf16.msra.mxu0 0
    %935 = vmatprep.subr.bf16.mxu0 0
    %936 = vmatpush1.bf16.msra.mxu0 0
    %937 = vmatprep.subr.bf16.mxu0 0
    %938 = vmatpush1.bf16.msra.mxu0 0
    %939 = vmatprep.subr.bf16.mxu0 0
    %940 = vmatpush1.bf16.msra.mxu0 0
    %941 = vmatprep.subr.bf16.mxu0 0
    %942 = vmatpush1.bf16.msra.mxu0 0
    %943 = vmatprep.subr.bf16.mxu0 0
    %944 = vmatpush1.bf16.msra.mxu0 0
    %945 = vmatprep.subr.bf16.mxu0 0
    %946 = vmatpush1.bf16.msra.mxu0 0
    %947 = vmatprep.subr.bf16.mxu0 0
    %948 = vmatpush1.bf16.msra.mxu0 0
    %949 = vmatprep.mubr.bf16.mxu0 0
    %950 = vmatmul.mubr.bf16.gmra.mrb[0].mxu0 %v678
    %v951 = vpop.f32.mrb[0].mxu0
    %v952 = vadd.f32 %v911, %v951
    %v953 = vpop.f32.mrb[0].mxu0
    %v954 = vpop.f32.mrb[0].mxu0
    %v955 = vadd.f32 %v914, %v954
    %v956 = vpop.f32.mrb[0].mxu0
    %957 = vdwg.mxu0
    %v958 = vtanh.pop %v952
    %v959 = vtanh.pop %v955
    %960 = vst [vmem:[#allocation8] sm:$0xff] %v958
    %961 = vst [vmem:[#allocation8 + $0x8] sm:$0xff] %v959
    // Predicated region
    $region26: #{tpu_custom_call.1} parent=1 // pred_check
      _
    $region27: #{tpu_custom_call.1} parent=1 // pred_check_branch
      %963 = sbr.rel (0) target = $region29
    $region28: #{tpu_custom_call.1} parent=1 // pred_region
      %s965 = ssub.s32 256, 256
      %966 = vsyncadd [#allocation4], %s965
      %s967 = sshll.u32 [#allocation8], 4
      %s968 = int_to_ptr.vmem [resolvable:$true] %s967
      %973 = dma.vmem_to_hbm [thread:$0]  %s968, 256, %s3, [#allocation4], 128, 128, 8
    $region29: #{tpu_custom_call.1} parent=1 // pred_fallthru
      _
    // Predicated region
    $region30: #{tpu_custom_call.1} parent=1 // pred_check
      _
    $region31: #{tpu_custom_call.1} parent=1 // pred_check_branch
      %975 = sbr.rel (0) target = $region33
    $region32: #{tpu_custom_call.1} parent=1 // pred_region
      %976 = dma.done [#allocation4], 256
    $region33: #{tpu_custom_call.1} parent=1 // pred_fallthru
      _
    %977 = vsyncpa [#allocation3], 1
    %978 = vsyncpa [#allocation6], 1
    %979 = vsyncpa [#allocation4], 1

</llo_original>
